<compile_context>
chip_gen: v7x
topology: tpu7x:2x2x1
jax: 0.10.0
libtpu: 0.0.40
codegen_flags: <defaults>
</compile_context>

<pallas_src>
import math

import jax
import jax.numpy as jnp
from jax.experimental import pallas as pl
from jax.experimental.pallas import tpu as pltpu


def _cdiv(a: int, b: int) -> int:
    return -(-a // b)


def _round_up(x: int, m: int) -> int:
    return ((x + m - 1) // m) * m


def fourier_features_kernel(x_ref, w_ref, o_ref):
    # x_ref: [TB, in_features]   (VMEM, native dtype)
    # w_ref: [in_features, half] (VMEM, pre-transposed, UNSCALED)
    # o_ref: [TB, 2*half]
    half = w_ref.shape[1]

    # MXU matmul, f32 accumulation; operands stay in their native dtype.
    t = jnp.dot(x_ref[...], w_ref[...], preferred_element_type=jnp.float32)

    # Fused sincos of 2*pi*t with ONE shared range reduction.
    #   2*pi*t = (pi/2)*q + a,  q = round(4*t),  a = 2*pi*(t - q/4) in [-pi/4, pi/4]
    q = jnp.round(4.0 * t)
    a = (2.0 * math.pi) * (t - 0.25 * q)
    a2 = a * a

    # Short shared polynomials on the reduced argument (error << 1e-6 on [-pi/4, pi/4]).
    c = 1.0 + a2 * (-0.5 + a2 * (1.0 / 24.0 + a2 * (-1.0 / 720.0 + a2 * (1.0 / 40320.0))))
    s = a * (1.0 + a2 * (-1.0 / 6.0 + a2 * (1.0 / 120.0 + a2 * (-1.0 / 5040.0))))

    # Quadrant fix-up (two's-complement & 3 handles negative q correctly).
    qi = q.astype(jnp.int32) & 3
    odd = (qi & 1) == 1
    cos_v = jnp.where(odd, s, c)
    sin_v = jnp.where(odd, c, s)
    cos_v = jnp.where((qi == 1) | (qi == 2), -cos_v, cos_v)
    sin_v = jnp.where(qi >= 2, -sin_v, sin_v)

    # Write the two halves directly (no concatenate / extra VMEM slab).
    # Lane-dense unmasked stores when half % 128 == 0; otherwise masked but correct.
    o_ref[:, :half] = cos_v.astype(o_ref.dtype)
    o_ref[:, half:] = sin_v.astype(o_ref.dtype)


def fourier_features(x, weight, *, block_b: int = 2048, out_dtype=None,
                     vmem_budget_bytes: int = 24 << 20):
    """x: [B, in_features], weight: [out_features//2, in_features] -> [B, out_features]."""
    B, in_features = x.shape
    half, in_w = weight.shape
    assert in_w == in_features
    out_features = 2 * half
    out_dtype = x.dtype if out_dtype is None else jnp.dtype(out_dtype)

    # One-time parameter prep: transpose to [K, N]. No 2*pi folding -- the range reduction
    # in the kernel needs the unscaled t, and keeping the scale in f32 in-kernel avoids
    # quantizing the phase when the weight is bf16.
    w_t = weight.T  # [in_features, half]

    # Dtype-correct sublane multiple for the batch tile.
    x_item = jnp.dtype(x.dtype).itemsize
    o_item = jnp.dtype(out_dtype).itemsize
    sub = {1: 32, 2: 16, 4: 8}.get(x_item, 8)

    # Cap the batch tile so double-buffered x/out tiles + f32 intermediates fit the
    # VMEM budget (safe for v7x's 32 MiB scoped default; plenty of headroom on v5e/v6e).
    bytes_per_row = (2 * in_features * x_item          # x tile, double-buffered
                     + 2 * out_features * o_item       # out tile, double-buffered
                     + 3 * out_features * 4)           # f32 intermediates (t, cos, sin)
    tb_cap = max(sub, (vmem_budget_bytes // max(bytes_per_row, 1)) // sub * sub)
    block_cap = max(sub, min(block_b, tb_cap))

    # Pick the number of grid steps: honor the block cap, prefer >=4 steps when B allows
    # (>=2 per v7x TensorCore so prefetch/writeback overlap survives the megacore split),
    # and balance tiles so padding waste stays small.
    min_steps = 4
    n_steps = max(_cdiv(B, block_cap), min(min_steps, max(1, B // sub)))
    tb = _round_up(_cdiv(B, n_steps), sub)
    b_pad = _round_up(B, tb)
    x_p = x if b_pad == B else jnp.pad(x, ((0, b_pad - B), (0, 0)))

    cost = pl.CostEstimate(
        flops=2 * b_pad * half * in_features          # MXU matmul
        + 30 * b_pad * half,                          # fused sincos polynomial / select work
        transcendentals=0,
        bytes_accessed=x_item * b_pad * in_features
        + jnp.dtype(w_t.dtype).itemsize * in_features * half
        + o_item * b_pad * out_features,
    )

    out = pl.pallas_call(
        fourier_features_kernel,
        out_shape=jax.ShapeDtypeStruct((b_pad, out_features), out_dtype),
        grid_spec=pltpu.PrefetchScalarGridSpec(
            num_scalar_prefetch=0,
            grid=(b_pad // tb,),
            in_specs=[
                # x: tiled along batch -> pipelined HBM<->VMEM DMA.
                pl.BlockSpec((tb, in_features), lambda i: (i, 0)),
                # weight: same block every step -> stays VMEM-resident.
                pl.BlockSpec((in_features, half), lambda i: (0, 0)),
            ],
            out_specs=pl.BlockSpec((tb, out_features), lambda i: (i, 0)),
        ),
        compiler_params=pltpu.CompilerParams(
            # Batch steps are independent -> megacore sharding on v7x.
            dimension_semantics=("parallel",),
        ),
        cost_estimate=cost,
    )(x_p, w_t)

    return out if b_pad == B else out[:B]


if __name__ == "__main__":
    # Small shapes consistent with a timestep-embedding layer.
    batch = 200           # deliberately not a tile multiple -> exercises padding path
    in_features = 16
    out_features = 256    # half = 128 -> lane-dense unmasked stores
    std = 1.0

    key = jax.random.PRNGKey(0)
    k_x, k_w = jax.random.split(key)
    x = jax.random.normal(k_x, (batch, in_features), dtype=jnp.float32)
    # Deterministic parameter init mirroring torch.randn([out/2, in]) * std
    weight = jax.random.normal(k_w, (out_features // 2, in_features), dtype=jnp.float32) * std

    out = fourier_features(x, weight)
    out = jax.block_until_ready(out)

    # Pure-JAX reference check
    f_ref = 2.0 * math.pi * (x @ weight.T)
    ref = jnp.concatenate([jnp.cos(f_ref), jnp.sin(f_ref)], axis=-1)
    assert out.shape == (batch, out_features)
    assert jnp.allclose(out, ref, atol=5e-4, rtol=1e-4), float(jnp.max(jnp.abs(out - ref)))

    print("KERNEL_OK")
</pallas_src>

<mosaic_0001>
module attributes {stable_mosaic.version = 11 : i64} {
  func.func @fourier_features_kernel(%arg0: i32, %arg1: memref<56x16xf32, #tpu.memory_space<vmem>>, %arg2: memref<16x128xf32, #tpu.memory_space<vmem>>, %arg3: memref<56x256xf32, #tpu.memory_space<vmem>>) attributes {dimension_semantics = [#tpu.dimension_semantics<parallel>], iteration_bounds = array<i64: 4>, scalar_prefetch = 0 : i64, scratch_operands = 0 : i64, tpu.core_type = #tpu.core_type<tc>, window_params = [{transform_indices = @transform_0, window_bounds = array<i64: 56, 16>}, {pipeline_mode = #tpu.pipeline_mode<synchronous>, transform_indices = @transform_1, window_bounds = array<i64: 16, 128>}, {transform_indices = @transform_2, window_bounds = array<i64: 56, 256>}]} {
    %c0 = arith.constant 0 : index
    %c0_0 = arith.constant 0 : index
    %0 = vector.load %arg1[%c0, %c0_0] : memref<56x16xf32, #tpu.memory_space<vmem>>, vector<56x16xf32>
    %c0_1 = arith.constant 0 : index
    %c0_2 = arith.constant 0 : index
    %1 = vector.load %arg2[%c0_1, %c0_2] : memref<16x128xf32, #tpu.memory_space<vmem>>, vector<16x128xf32>
    %cst = arith.constant dense<0.000000e+00> : vector<56x128xf32>
    %2 = tpu.matmul %0, %1, %cst {dimension_numbers = #tpu.dot_dimension_numbers<[1], [0], [0], [1], [0, 0, 1, 1], [], []>} : vector<56x16xf32>, vector<16x128xf32>, vector<56x128xf32> -> vector<56x128xf32>
    %cst_3 = arith.constant 4.000000e+00 : f32
    %3 = vector.broadcast %cst_3 : f32 to vector<56x128xf32>
    %4 = arith.mulf %3, %2 : vector<56x128xf32>
    %5 = math.roundeven %4 : vector<56x128xf32>
    %cst_4 = arith.constant 2.500000e-01 : f32
    %6 = vector.broadcast %cst_4 : f32 to vector<56x128xf32>
    %7 = arith.mulf %6, %5 : vector<56x128xf32>
    %8 = arith.subf %2, %7 : vector<56x128xf32>
    %cst_5 = arith.constant 6.28318548 : f32
    %9 = vector.broadcast %cst_5 : f32 to vector<56x128xf32>
    %10 = arith.mulf %9, %8 : vector<56x128xf32>
    %11 = arith.mulf %10, %10 : vector<56x128xf32>
    %cst_6 = arith.constant 2.48015876E-5 : f32
    %12 = vector.broadcast %cst_6 : f32 to vector<56x128xf32>
    %13 = arith.mulf %11, %12 : vector<56x128xf32>
    %cst_7 = arith.constant -0.00138888892 : f32
    %14 = vector.broadcast %cst_7 : f32 to vector<56x128xf32>
    %15 = arith.addf %14, %13 : vector<56x128xf32>
    %16 = arith.mulf %11, %15 : vector<56x128xf32>
    %cst_8 = arith.constant 0.0416666679 : f32
    %17 = vector.broadcast %cst_8 : f32 to vector<56x128xf32>
    %18 = arith.addf %17, %16 : vector<56x128xf32>
    %19 = arith.mulf %11, %18 : vector<56x128xf32>
    %cst_9 = arith.constant -5.000000e-01 : f32
    %20 = vector.broadcast %cst_9 : f32 to vector<56x128xf32>
    %21 = arith.addf %20, %19 : vector<56x128xf32>
    %22 = arith.mulf %11, %21 : vector<56x128xf32>
    %cst_10 = arith.constant 1.000000e+00 : f32
    %23 = vector.broadcast %cst_10 : f32 to vector<56x128xf32>
    %24 = arith.addf %23, %22 : vector<56x128xf32>
    %cst_11 = arith.constant -1.98412701E-4 : f32
    %25 = vector.broadcast %cst_11 : f32 to vector<56x128xf32>
    %26 = arith.mulf %11, %25 : vector<56x128xf32>
    %cst_12 = arith.constant 0.00833333377 : f32
    %27 = vector.broadcast %cst_12 : f32 to vector<56x128xf32>
    %28 = arith.addf %27, %26 : vector<56x128xf32>
    %29 = arith.mulf %11, %28 : vector<56x128xf32>
    %cst_13 = arith.constant -0.166666672 : f32
    %30 = vector.broadcast %cst_13 : f32 to vector<56x128xf32>
    %31 = arith.addf %30, %29 : vector<56x128xf32>
    %32 = arith.mulf %11, %31 : vector<56x128xf32>
    %cst_14 = arith.constant 1.000000e+00 : f32
    %33 = vector.broadcast %cst_14 : f32 to vector<56x128xf32>
    %34 = arith.addf %33, %32 : vector<56x128xf32>
    %35 = arith.mulf %10, %34 : vector<56x128xf32>
    %36 = arith.fptosi %5 : vector<56x128xf32> to vector<56x128xi32>
    %c3_i32 = arith.constant 3 : i32
    %37 = vector.broadcast %c3_i32 : i32 to vector<56x128xi32>
    %38 = arith.andi %36, %37 : vector<56x128xi32>
    %c1_i32 = arith.constant 1 : i32
    %39 = vector.broadcast %c1_i32 : i32 to vector<56x128xi32>
    %40 = arith.andi %38, %39 : vector<56x128xi32>
    %c1_i32_15 = arith.constant 1 : i32
    %41 = vector.broadcast %c1_i32_15 : i32 to vector<56x128xi32>
    %42 = arith.cmpi eq, %40, %41 : vector<56x128xi32>
    %43 = arith.select %42, %35, %24 : vector<56x128xi1>, vector<56x128xf32>
    %44 = arith.select %42, %24, %35 : vector<56x128xi1>, vector<56x128xf32>
    %c1_i32_16 = arith.constant 1 : i32
    %45 = vector.broadcast %c1_i32_16 : i32 to vector<56x128xi32>
    %46 = arith.cmpi eq, %38, %45 : vector<56x128xi32>
    %c2_i32 = arith.constant 2 : i32
    %47 = vector.broadcast %c2_i32 : i32 to vector<56x128xi32>
    %48 = arith.cmpi eq, %38, %47 : vector<56x128xi32>
    %49 = arith.ori %46, %48 : vector<56x128xi1>
    %cst_17 = arith.constant 0.000000e+00 : f32
    %50 = vector.broadcast %cst_17 : f32 to vector<56x128xf32>
    %51 = arith.subf %50, %43 : vector<56x128xf32>
    %52 = arith.select %49, %51, %43 : vector<56x128xi1>, vector<56x128xf32>
    %c2_i32_18 = arith.constant 2 : i32
    %53 = vector.broadcast %c2_i32_18 : i32 to vector<56x128xi32>
    %54 = arith.cmpi sge, %38, %53 : vector<56x128xi32>
    %cst_19 = arith.constant 0.000000e+00 : f32
    %55 = vector.broadcast %cst_19 : f32 to vector<56x128xf32>
    %56 = arith.subf %55, %44 : vector<56x128xf32>
    %57 = arith.select %54, %56, %44 : vector<56x128xi1>, vector<56x128xf32>
    %c0_20 = arith.constant 0 : index
    %c0_21 = arith.constant 0 : index
    %58 = vector.load %arg3[%c0_20, %c0_21] : memref<56x256xf32, #tpu.memory_space<vmem>>, vector<56x128xf32>
    tpu.vector_store %arg3[%c0_20, %c0_21], %52 {strides = array<i32>} : memref<56x256xf32, #tpu.memory_space<vmem>>, vector<56x128xf32>,
    %c0_22 = arith.constant 0 : index
    %c128 = arith.constant 128 : index
    %59 = vector.load %arg3[%c0_22, %c128] : memref<56x256xf32, #tpu.memory_space<vmem>>, vector<56x128xf32>
    tpu.vector_store %arg3[%c0_22, %c128], %57 {strides = array<i32>} : memref<56x256xf32, #tpu.memory_space<vmem>>, vector<56x128xf32>,
    return
  }
  func.func @transform_0(%arg0: i32) -> (i32, i32) {
    %c0_i32 = arith.constant 0 : i32
    %c0_i32_0 = arith.constant 0 : i32
    return %arg0, %c0_i32 : i32, i32
  }
  func.func @transform_1(%arg0: i32) -> (i32, i32) {
    %c0_i32 = arith.constant 0 : i32
    %c0_i32_0 = arith.constant 0 : i32
    %c0_i32_1 = arith.constant 0 : i32
    return %c0_i32, %c0_i32_0 : i32, i32
  }
  func.func @transform_2(%arg0: i32) -> (i32, i32) {
    %c0_i32 = arith.constant 0 : i32
    %c0_i32_0 = arith.constant 0 : i32
    return %arg0, %c0_i32 : i32, i32
  }
}

</mosaic_0001>

<llo_original>
// kernel: tpu_custom_call.1
$region0: #{tpu_custom_call.1}
  #allocation0 [shape = 'u32[]', space=smem, size = 0x4, offset = 0x4, fixed_abs, tag = 'smem constant byte address 0x4 - core index']
  #allocation1 [shape = 'u32[144,128]{1,0:T(1,128)}', space=vmem, size = 0x12000, scoped, tag = 'internal scratch']
  %s0 = inlined_call_operand.vmem [shape: f32[224,16], index: 0, kind: input, shape index: {}]
  %s1 = inlined_call_operand.vmem [shape: f32[16,128], index: 1, kind: input, shape index: {}]
  %s2 = inlined_call_operand.hbm [shape: f32[224,256], index: 2, kind: output, shape index: {}]
  %s3 = sld [smem:[#allocation0]]
  $region41: #{tpu_custom_call.1} parent=0
    _
  %s5 = ssub.s32 1, %s3
  %s6 = scalar_select 0, %s5, %s3
  $region1: #{tpu_custom_call.1} parent=0
    #allocation2 [shape = 'u8[114688]{0}', space=vmem, size = 0x1c000, scoped, tag = 'output window, operand 0']
    #allocation3 [shape = 's32[2]{0}', space=sflag, size = 0x8, scoped, tag = 'scoped memory for tpu_custom_call.1']
    %7 = vsyncpa [#allocation3], 0
    %s8 = scalar_lea.sflag [#allocation3], 1
    %9 = vsyncpa %s8, 0
    loop: start=0, step=1, limit=6
    $region2: #{tpu_custom_call.1} parent=1 // loop_pre_header
      _
    $region3: #{tpu_custom_call.1} parent=1 // loop_header
      %s11 = sphi 0, %s15
      %p12 = scmp.ge.s32.totalorder %s11, 6
      %s21 = sphi 0, %s23
      %s24 = sphi 0, %s21
      %s25 = sphi 0, %s24
      %s41 = sphi 0, %s25
      %s45 = sphi 0, %s45
      %s47 = sphi 0, %s45
      %s48 = sphi 0, %s47
      %s62 = sphi 0, %s48
      %s68 = sphi 0, %s70
      %s71 = sphi 0, %s68
      %s72 = sphi 0, %s71
      %s88 = sphi 0, %s72
    $region4: #{tpu_custom_call.1} parent=1 // loop_header_branch
      %14 = sbr.rel (%p12) target = $region8
    $region5: #{tpu_custom_call.1} parent=1 // loop_body
      %s16 = ssub.s32 %s11, 1
      %s17 = ssub.s32 %s11, 2
      %s18 = sadd.s32 %s11, 1
      %s19 = ssub.s32 %s11, %s18
      %p20 = scmp.eq.s32.totalorder %s19, 0
      %s22 = sadd.s32 %s21, 1
      %s23 = scalar_select %p20, %s21, %s22
      %p26 = pneg %p20
      %p27 = scmp.eq.s32.totalorder %s11, 3
      %p28 = por %p26, %p27
      %p29 = scmp.ne.s32.totalorder %s21, %s24
      %p30 = scmp.eq.s32.totalorder %s11, 0
      %p31 = por %p29, %p30
      %p32 = scmp.ne.s32.totalorder %s21, %s24
      %p33 = scmp.eq.s32.totalorder %s16, 3
      %p34 = por %p32, %p33
      %p35 = scmp.ne.s32.totalorder %s24, %s25
      %p36 = scmp.eq.s32.totalorder %s16, 0
      %p37 = por %p35, %p36
      %p38 = scmp.ne.s32.totalorder %s24, %s25
      %p39 = scmp.eq.s32.totalorder %s17, 3
      %p40 = por %p38, %p39
      %p42 = scmp.ne.s32.totalorder %s25, %s41
      %p43 = scmp.eq.s32.totalorder %s17, 0
      %p44 = por %p42, %p43
      %s46 = sadd.s32 %s45, 1
      %p49 = scmp.eq.s32.totalorder %s11, 3
      %p50 = scmp.ne.s32.totalorder %s45, %s47
      %p51 = scmp.eq.s32.totalorder %s11, 0
      %p52 = por %p50, %p51
      %p53 = scmp.ne.s32.totalorder %s45, %s47
      %p54 = scmp.eq.s32.totalorder %s16, 3
      %p55 = por %p53, %p54
      %p56 = scmp.ne.s32.totalorder %s47, %s48
      %p57 = scmp.eq.s32.totalorder %s16, 0
      %p58 = por %p56, %p57
      %p59 = scmp.ne.s32.totalorder %s47, %s48
      %p60 = scmp.eq.s32.totalorder %s17, 3
      %p61 = por %p59, %p60
      %p63 = scmp.ne.s32.totalorder %s48, %s62
      %p64 = scmp.eq.s32.totalorder %s17, 0
      %p65 = por %p63, %p64
      %s66 = ssub.s32 %s11, %s18
      %p67 = scmp.eq.s32.totalorder %s66, 0
      %s69 = sadd.s32 %s68, 1
      %s70 = scalar_select %p67, %s68, %s69
      %p73 = pneg %p67
      %p74 = scmp.eq.s32.totalorder %s11, 3
      %p75 = por %p73, %p74
      %p76 = scmp.ne.s32.totalorder %s68, %s71
      %p77 = scmp.eq.s32.totalorder %s11, 0
      %p78 = por %p76, %p77
      %p79 = scmp.ne.s32.totalorder %s68, %s71
      %p80 = scmp.eq.s32.totalorder %s16, 3
      %p81 = por %p79, %p80
      %p82 = scmp.ne.s32.totalorder %s71, %s72
      %p83 = scmp.eq.s32.totalorder %s16, 0
      %p84 = por %p82, %p83
      %p85 = scmp.ne.s32.totalorder %s71, %s72
      %p86 = scmp.eq.s32.totalorder %s17, 3
      %p87 = por %p85, %p86
      %p89 = scmp.ne.s32.totalorder %s72, %s88
      %p90 = scmp.eq.s32.totalorder %s17, 0
      %p91 = por %p89, %p90
      %p92 = scmp.le.s32.totalorder 1, %s11
      %p93 = scmp.lt.s32.totalorder %s11, 5
      %p94 = pnand %p92, %p93
      %p95 = pneg %p94
      // Predicated region
      $region9: #{tpu_custom_call.1} parent=5 // pred_check
        _
      $region10: #{tpu_custom_call.1} parent=5 // pred_check_branch
        %97 = sbr.rel (%p94) target = $region12
      $region11: #{tpu_custom_call.1} parent=5 // pred_region
        %s98 = ssub.s32 %s11, 1
        // Predicated region
        $region13: #{tpu_custom_call.1} parent=11 // pred_check
          %p99 = pneg %p58
        $region14: #{tpu_custom_call.1} parent=11 // pred_check_branch
          %101 = sbr.rel (%p99) target = $region16
        $region15: #{tpu_custom_call.1} parent=11 // pred_region
          _
        $region16: #{tpu_custom_call.1} parent=11 // pred_fallthru
          _
      $region12: #{tpu_custom_call.1} parent=5 // pred_fallthru
        _
      %p102 = scmp.lt.s32.totalorder %s11, 4
      // Predicated region
      $region17: #{tpu_custom_call.1} parent=5 // pred_check
        %p103 = pneg %p102
      $region18: #{tpu_custom_call.1} parent=5 // pred_check_branch
        %105 = sbr.rel (%p103) target = $region20
      $region19: #{tpu_custom_call.1} parent=5 // pred_region
        // Predicated region
        $region21: #{tpu_custom_call.1} parent=19 // pred_check
          %p106 = pneg %p31
        $region22: #{tpu_custom_call.1} parent=19 // pred_check_branch
          %108 = sbr.rel (%p106) target = $region24
        $region23: #{tpu_custom_call.1} parent=19 // pred_region
          %s109 = smul.u32 7, %s11
          %p110 = scmp.lt.s32.totalorder %s109, 27
          %s111 = scalar_select %p110, %s109, 27
          %s112 = smul.addr %s111, 8
          %s113 = scalar_lea.vmem %s0, %s112
          %s114 = smul.u32 7, %s11
        $region24: #{tpu_custom_call.1} parent=19 // pred_fallthru
          _
      $region20: #{tpu_custom_call.1} parent=5 // pred_fallthru
        _
      %p115 = scmp.le.s32.totalorder 1, %s11
      %p116 = scmp.lt.s32.totalorder %s11, 5
      %p117 = pnand %p115, %p116
      %p118 = pneg %p117
      // Predicated region
      $region25: #{tpu_custom_call.1} parent=5 // pred_check
        _
      $region26: #{tpu_custom_call.1} parent=5 // pred_check_branch
        %120 = sbr.rel (%p117) target = $region28
      $region27: #{tpu_custom_call.1} parent=5 // pred_region
        %s121 = ssub.s32 %s11, 1
        %s122 = smul.u32 7, %s16
        %p123 = scmp.lt.s32.totalorder %s122, 27
        %s124 = scalar_select %p123, %s122, 27
        %s125 = smul.addr %s124, 8
        %s126 = scalar_lea.vmem %s0, %s125
        %p127 = pneg %p37
        %p128 = pneg %p34
        %p129 = pneg %p58
        %p130 = pneg %p55
        %p131 = pneg %p84
        %p132 = pneg %p81
        %s133 = sand.u32 %s71, 1
        %s134 = scalar_lea.sflag [#allocation3], %s133
        %s135 = sand.u32 %s71, 1
        %s136 = smul.addr %s135, 112
        %s137 = scalar_lea.vmem [#allocation2], %s136
        %s138 = smul.u32 7, %s16
        %p139 = scmp.lt.s32.totalorder %s138, 27
        %s140 = scalar_select %p139, %s138, 27
        %s141 = smul.addr %s140, 8
        %s142 = scalar_lea.vmem %s0, %s141
        %s143 = smul.u32 7, %s16
        %s144 = smul.u32 7, %s16
        %v145 = vld [vmem:[%s142] sm:$0xff]
        %v146 = vld [vmem:[%s142 + $0x8] sm:$0xff]
        %v147 = vld [vmem:[%s142 + $0x10] sm:$0xff]
        %v148 = vld [vmem:[%s142 + $0x18] sm:$0xff]
        %v149 = vld [vmem:[%s142 + $0x20] sm:$0xff]
        %v150 = vld [vmem:[%s142 + $0x28] sm:$0xff]
        %v151 = vld [vmem:[%s142 + $0x30] sm:$0xff]
        %v152 = vld [vmem:[%s1] sm:$0xff]
        %v153 = vld [vmem:[%s1 + $0x8] sm:$0xff]
        %vm154 = vcmask 130048
        %v156 = vsel %vm154, %v145, 0
        %v159 = vsel %vm154, %v146, 0
        %v162 = vsel %vm154, %v147, 0
        %v165 = vsel %vm154, %v148, 0
        %v168 = vsel %vm154, %v149, 0
        %v171 = vsel %vm154, %v150, 0
        %v174 = vsel %vm154, %v151, 0
        %176 = vmatprep.subr.mxu0 0.0
        %177 = vmatpush1.msra.mxu0 %v152
        %178 = vmatprep.subr.mxu0 0.0
        %179 = vmatpush1.msra.mxu0 %v153
        %180 = vmatprep.subr.mxu0 0.0
        %181 = vmatpush1.msra.mxu0 0.0
        %182 = vmatprep.subr.mxu0 0.0
        %183 = vmatpush1.msra.mxu0 0.0
        %184 = vmatprep.subr.mxu0 0.0
        %185 = vmatpush1.msra.mxu0 0.0
        %186 = vmatprep.subr.mxu0 0.0
        %187 = vmatpush1.msra.mxu0 0.0
        %188 = vmatprep.subr.mxu0 0.0
        %189 = vmatpush1.msra.mxu0 0.0
        %190 = vmatprep.subr.mxu0 0.0
        %191 = vmatpush1.msra.mxu0 0.0
        %192 = vmatprep.subr.mxu0 0.0
        %193 = vmatpush1.msra.mxu0 0.0
        %194 = vmatprep.subr.mxu0 0.0
        %195 = vmatpush1.msra.mxu0 0.0
        %196 = vmatprep.subr.mxu0 0.0
        %197 = vmatpush1.msra.mxu0 0.0
        %198 = vmatprep.subr.mxu0 0.0
        %199 = vmatpush1.msra.mxu0 0.0
        %200 = vmatprep.subr.mxu0 0.0
        %201 = vmatpush1.msra.mxu0 0.0
        %202 = vmatprep.subr.mxu0 0.0
        %203 = vmatpush1.msra.mxu0 0.0
        %204 = vmatprep.subr.mxu0 0.0
        %205 = vmatpush1.msra.mxu0 0.0
        %206 = vmatprep.subr.mxu0 0.0
        %207 = vmatpush1.msra.mxu0 0.0
        %208 = vmatprep.subr.mxu0 0.0
        %209 = vmatpush1.msra.mxu0 0.0
        %210 = vmatprep.subr.mxu0 0.0
        %211 = vmatpush1.msra.mxu0 0.0
        %212 = vmatprep.subr.mxu0 0.0
        %213 = vmatpush1.msra.mxu0 0.0
        %214 = vmatprep.subr.mxu0 0.0
        %215 = vmatpush1.msra.mxu0 0.0
        %216 = vmatprep.subr.mxu0 0.0
        %217 = vmatpush1.msra.mxu0 0.0
        %218 = vmatprep.subr.mxu0 0.0
        %219 = vmatpush1.msra.mxu0 0.0
        %220 = vmatprep.subr.mxu0 0.0
        %221 = vmatpush1.msra.mxu0 0.0
        %222 = vmatprep.subr.mxu0 0.0
        %223 = vmatpush1.msra.mxu0 0.0
        %224 = vmatprep.subr.mxu0 0.0
        %225 = vmatpush1.msra.mxu0 0.0
        %226 = vmatprep.subr.mxu0 0.0
        %227 = vmatpush1.msra.mxu0 0.0
        %228 = vmatprep.subr.mxu0 0.0
        %229 = vmatpush1.msra.mxu0 0.0
        %230 = vmatprep.subr.mxu0 0.0
        %231 = vmatpush1.msra.mxu0 0.0
        %232 = vmatprep.subr.mxu0 0.0
        %233 = vmatpush1.msra.mxu0 0.0
        %234 = vmatprep.subr.mxu0 0.0
        %235 = vmatpush1.msra.mxu0 0.0
        %236 = vmatprep.subr.mxu0 0.0
        %237 = vmatpush1.msra.mxu0 0.0
        %238 = vmatprep.subr.mxu0 0.0
        %239 = vmatpush1.msra.mxu0 0.0
        %240 = vmatprep.mubr.f32.mxu0 0.0
        %241 = vmatmul.mubr.f32.gmra.mrb[0].mxu0 %v156
        %v242 = vpop.f32.mrb[0].mxu0
        %v243 = vadd.f32 0.0, %v242
        %v244 = vpop.f32.mrb[0].mxu0
        %245 = vmatprep.mubr.f32.mxu0 0.0
        %246 = vmatmul.mubr.f32.gmra.mrb[0].mxu0 %v159
        %v247 = vpop.f32.mrb[0].mxu0
        %v248 = vadd.f32 0.0, %v247
        %v249 = vpop.f32.mrb[0].mxu0
        %250 = vmatprep.mubr.f32.mxu0 0.0
        %251 = vmatmul.mubr.f32.gmra.mrb[0].mxu0 %v162
        %v252 = vpop.f32.mrb[0].mxu0
        %v253 = vadd.f32 0.0, %v252
        %v254 = vpop.f32.mrb[0].mxu0
        %255 = vmatprep.mubr.f32.mxu0 0.0
        %256 = vmatmul.mubr.f32.gmra.mrb[0].mxu0 %v165
        %v257 = vpop.f32.mrb[0].mxu0
        %v258 = vadd.f32 0.0, %v257
        %v259 = vpop.f32.mrb[0].mxu0
        %260 = vmatprep.mubr.f32.mxu0 0.0
        %261 = vmatmul.mubr.f32.gmra.mrb[0].mxu0 %v168
        %v262 = vpop.f32.mrb[0].mxu0
        %v263 = vadd.f32 0.0, %v262
        %v264 = vpop.f32.mrb[0].mxu0
        %265 = vmatprep.mubr.f32.mxu0 0.0
        %266 = vmatmul.mubr.f32.gmra.mrb[0].mxu0 %v171
        %v267 = vpop.f32.mrb[0].mxu0
        %v268 = vadd.f32 0.0, %v267
        %v269 = vpop.f32.mrb[0].mxu0
        %270 = vmatprep.mubr.f32.mxu0 0.0
        %271 = vmatmul.mubr.f32.gmra.mrb[0].mxu0 %v174
        %v272 = vpop.f32.mrb[0].mxu0
        %v273 = vadd.f32 0.0, %v272
        %v274 = vpop.f32.mrb[0].mxu0
        %275 = vdwg.mxu0
        %v276 = vmul.f32 %v243, 4.0
        %v277 = vmul.f32 %v248, 4.0
        %v278 = vmul.f32 %v253, 4.0
        %v279 = vmul.f32 %v258, 4.0
        %v280 = vmul.f32 %v263, 4.0
        %v281 = vmul.f32 %v268, 4.0
        %v282 = vmul.f32 %v273, 4.0
        %v283 = vround.ne.pseudo %v276
        %v284 = vround.ne.pseudo %v277
        %v285 = vround.ne.pseudo %v278
        %v286 = vround.ne.pseudo %v279
        %v287 = vround.ne.pseudo %v280
        %v288 = vround.ne.pseudo %v281
        %v289 = vround.ne.pseudo %v282
        %v290 = vmul.f32 %v283, 0.25
        %v291 = vmul.f32 %v284, 0.25
        %v292 = vmul.f32 %v285, 0.25
        %v293 = vmul.f32 %v286, 0.25
        %v294 = vmul.f32 %v287, 0.25
        %v295 = vmul.f32 %v288, 0.25
        %v296 = vmul.f32 %v289, 0.25
        %v297 = vsub.f32 %v243, %v290
        %v298 = vsub.f32 %v248, %v291
        %v299 = vsub.f32 %v253, %v292
        %v300 = vsub.f32 %v258, %v293
        %v301 = vsub.f32 %v263, %v294
        %v302 = vsub.f32 %v268, %v295
        %v303 = vsub.f32 %v273, %v296
        %v304 = vmul.f32 %v297, 6.2831855
        %v305 = vmul.f32 %v298, 6.2831855
        %v306 = vmul.f32 %v299, 6.2831855
        %v307 = vmul.f32 %v300, 6.2831855
        %v308 = vmul.f32 %v301, 6.2831855
        %v309 = vmul.f32 %v302, 6.2831855
        %v310 = vmul.f32 %v303, 6.2831855
        %v311 = vmul.f32 %v304, %v304
        %v312 = vmul.f32 %v305, %v305
        %v313 = vmul.f32 %v306, %v306
        %v314 = vmul.f32 %v307, %v307
        %v315 = vmul.f32 %v308, %v308
        %v316 = vmul.f32 %v309, %v309
        %v317 = vmul.f32 %v310, %v310
        %v318 = vmul.f32 %v311, 2.4801588e-05
        %v319 = vmul.f32 %v312, 2.4801588e-05
        %v320 = vmul.f32 %v313, 2.4801588e-05
        %v321 = vmul.f32 %v314, 2.4801588e-05
        %v322 = vmul.f32 %v315, 2.4801588e-05
        %v323 = vmul.f32 %v316, 2.4801588e-05
        %v324 = vmul.f32 %v317, 2.4801588e-05
        %v325 = vadd.f32 %v318, -0.0013888889
        %v326 = vadd.f32 %v319, -0.0013888889
        %v327 = vadd.f32 %v320, -0.0013888889
        %v328 = vadd.f32 %v321, -0.0013888889
        %v329 = vadd.f32 %v322, -0.0013888889
        %v330 = vadd.f32 %v323, -0.0013888889
        %v331 = vadd.f32 %v324, -0.0013888889
        %v332 = vmul.f32 %v311, %v325
        %v333 = vmul.f32 %v312, %v326
        %v334 = vmul.f32 %v313, %v327
        %v335 = vmul.f32 %v314, %v328
        %v336 = vmul.f32 %v315, %v329
        %v337 = vmul.f32 %v316, %v330
        %v338 = vmul.f32 %v317, %v331
        %v339 = vadd.f32 %v332, 0.041666668
        %v340 = vadd.f32 %v333, 0.041666668
        %v341 = vadd.f32 %v334, 0.041666668
        %v342 = vadd.f32 %v335, 0.041666668
        %v343 = vadd.f32 %v336, 0.041666668
        %v344 = vadd.f32 %v337, 0.041666668
        %v345 = vadd.f32 %v338, 0.041666668
        %v346 = vmul.f32 %v311, %v339
        %v347 = vmul.f32 %v312, %v340
        %v348 = vmul.f32 %v313, %v341
        %v349 = vmul.f32 %v314, %v342
        %v350 = vmul.f32 %v315, %v343
        %v351 = vmul.f32 %v316, %v344
        %v352 = vmul.f32 %v317, %v345
        %v353 = vadd.f32 %v346, -0.5
        %v354 = vadd.f32 %v347, -0.5
        %v355 = vadd.f32 %v348, -0.5
        %v356 = vadd.f32 %v349, -0.5
        %v357 = vadd.f32 %v350, -0.5
        %v358 = vadd.f32 %v351, -0.5
        %v359 = vadd.f32 %v352, -0.5
        %v360 = vmul.f32 %v311, %v353
        %v361 = vmul.f32 %v312, %v354
        %v362 = vmul.f32 %v313, %v355
        %v363 = vmul.f32 %v314, %v356
        %v364 = vmul.f32 %v315, %v357
        %v365 = vmul.f32 %v316, %v358
        %v366 = vmul.f32 %v317, %v359
        %v367 = vadd.f32 %v360, 1.0
        %v368 = vadd.f32 %v361, 1.0
        %v369 = vadd.f32 %v362, 1.0
        %v370 = vadd.f32 %v363, 1.0
        %v371 = vadd.f32 %v364, 1.0
        %v372 = vadd.f32 %v365, 1.0
        %v373 = vadd.f32 %v366, 1.0
        %v374 = vmul.f32 %v311, -0.0001984127
        %v375 = vmul.f32 %v312, -0.0001984127
        %v376 = vmul.f32 %v313, -0.0001984127
        %v377 = vmul.f32 %v314, -0.0001984127
        %v378 = vmul.f32 %v315, -0.0001984127
        %v379 = vmul.f32 %v316, -0.0001984127
        %v380 = vmul.f32 %v317, -0.0001984127
        %v381 = vadd.f32 %v374, 0.008333334
        %v382 = vadd.f32 %v375, 0.008333334
        %v383 = vadd.f32 %v376, 0.008333334
        %v384 = vadd.f32 %v377, 0.008333334
        %v385 = vadd.f32 %v378, 0.008333334
        %v386 = vadd.f32 %v379, 0.008333334
        %v387 = vadd.f32 %v380, 0.008333334
        %v388 = vmul.f32 %v311, %v381
        %v389 = vmul.f32 %v312, %v382
        %v390 = vmul.f32 %v313, %v383
        %v391 = vmul.f32 %v314, %v384
        %v392 = vmul.f32 %v315, %v385
        %v393 = vmul.f32 %v316, %v386
        %v394 = vmul.f32 %v317, %v387
        %v395 = vadd.f32 %v388, -0.16666667
        %v396 = vadd.f32 %v389, -0.16666667
        %v397 = vadd.f32 %v390, -0.16666667
        %v398 = vadd.f32 %v391, -0.16666667
        %v399 = vadd.f32 %v392, -0.16666667
        %v400 = vadd.f32 %v393, -0.16666667
        %v401 = vadd.f32 %v394, -0.16666667
        %v402 = vmul.f32 %v311, %v395
        %v403 = vmul.f32 %v312, %v396
        %v404 = vmul.f32 %v313, %v397
        %v405 = vmul.f32 %v314, %v398
        %v406 = vmul.f32 %v315, %v399
        %v407 = vmul.f32 %v316, %v400
        %v408 = vmul.f32 %v317, %v401
        %v409 = vadd.f32 %v402, 1.0
        %v410 = vadd.f32 %v403, 1.0
        %v411 = vadd.f32 %v404, 1.0
        %v412 = vadd.f32 %v405, 1.0
        %v413 = vadd.f32 %v406, 1.0
        %v414 = vadd.f32 %v407, 1.0
        %v415 = vadd.f32 %v408, 1.0
        %v416 = vmul.f32 %v304, %v409
        %v417 = vmul.f32 %v305, %v410
        %v418 = vmul.f32 %v306, %v411
        %v419 = vmul.f32 %v307, %v412
        %v420 = vmul.f32 %v308, %v413
        %v421 = vmul.f32 %v309, %v414
        %v422 = vmul.f32 %v310, %v415
        %v423 = vcvt.f32.s32.ties.to.even %v276
        %v424 = vcvt.f32.s32.ties.to.even %v277
        %v425 = vcvt.f32.s32.ties.to.even %v278
        %v426 = vcvt.f32.s32.ties.to.even %v279
        %v427 = vcvt.f32.s32.ties.to.even %v280
        %v428 = vcvt.f32.s32.ties.to.even %v281
        %v429 = vcvt.f32.s32.ties.to.even %v282
        %v430 = vand.u32 %v423, 3
        %v431 = vand.u32 %v424, 3
        %v432 = vand.u32 %v425, 3
        %v433 = vand.u32 %v426, 3
        %v434 = vand.u32 %v427, 3
        %v435 = vand.u32 %v428, 3
        %v436 = vand.u32 %v429, 3
        %v437 = vand.u32 %v430, 1
        %v438 = vand.u32 %v431, 1
        %v439 = vand.u32 %v432, 1
        %v440 = vand.u32 %v433, 1
        %v441 = vand.u32 %v434, 1
        %v442 = vand.u32 %v435, 1
        %v443 = vand.u32 %v436, 1
        %vm444 = vcmp.eq.s32.totalorder %v437, 1
        %vm445 = vcmp.eq.s32.totalorder %v438, 1
        %vm446 = vcmp.eq.s32.totalorder %v439, 1
        %vm447 = vcmp.eq.s32.totalorder %v440, 1
        %vm448 = vcmp.eq.s32.totalorder %v441, 1
        %vm449 = vcmp.eq.s32.totalorder %v442, 1
        %vm450 = vcmp.eq.s32.totalorder %v443, 1
        %v451 = vsel %vm444, %v416, %v367
        %v452 = vsel %vm445, %v417, %v368
        %v453 = vsel %vm446, %v418, %v369
        %v454 = vsel %vm447, %v419, %v370
        %v455 = vsel %vm448, %v420, %v371
        %v456 = vsel %vm449, %v421, %v372
        %v457 = vsel %vm450, %v422, %v373
        %v458 = vsel %vm444, %v367, %v416
        %v459 = vsel %vm445, %v368, %v417
        %v460 = vsel %vm446, %v369, %v418
        %v461 = vsel %vm447, %v370, %v419
        %v462 = vsel %vm448, %v371, %v420
        %v463 = vsel %vm449, %v372, %v421
        %v464 = vsel %vm450, %v373, %v422
        %vm465 = vcmp.eq.s32.totalorder %v430, 1
        %vm466 = vcmp.eq.s32.totalorder %v431, 1
        %vm467 = vcmp.eq.s32.totalorder %v432, 1
        %vm468 = vcmp.eq.s32.totalorder %v433, 1
        %vm469 = vcmp.eq.s32.totalorder %v434, 1
        %vm470 = vcmp.eq.s32.totalorder %v435, 1
        %vm471 = vcmp.eq.s32.totalorder %v436, 1
        %vm472 = vcmp.eq.s32.totalorder %v430, 2
        %vm473 = vcmp.eq.s32.totalorder %v431, 2
        %vm474 = vcmp.eq.s32.totalorder %v432, 2
        %vm475 = vcmp.eq.s32.totalorder %v433, 2
        %vm476 = vcmp.eq.s32.totalorder %v434, 2
        %vm477 = vcmp.eq.s32.totalorder %v435, 2
        %vm478 = vcmp.eq.s32.totalorder %v436, 2
        %vm479 = vmor %vm465, %vm472
        %vm480 = vmor %vm466, %vm473
        %vm481 = vmor %vm467, %vm474
        %vm482 = vmor %vm468, %vm475
        %vm483 = vmor %vm469, %vm476
        %vm484 = vmor %vm470, %vm477
        %vm485 = vmor %vm471, %vm478
        %v486 = vsub.f32 0.0, %v451
        %v487 = vsub.f32 0.0, %v452
        %v488 = vsub.f32 0.0, %v453
        %v489 = vsub.f32 0.0, %v454
        %v490 = vsub.f32 0.0, %v455
        %v491 = vsub.f32 0.0, %v456
        %v492 = vsub.f32 0.0, %v457
        %v493 = vsel %vm479, %v486, %v451
        %v494 = vsel %vm480, %v487, %v452
        %v495 = vsel %vm481, %v488, %v453
        %v496 = vsel %vm482, %v489, %v454
        %v497 = vsel %vm483, %v490, %v455
        %v498 = vsel %vm484, %v491, %v456
        %v499 = vsel %vm485, %v492, %v457
        %vm500 = vcmp.ge.s32.totalorder %v430, 2
        %vm501 = vcmp.ge.s32.totalorder %v431, 2
        %vm502 = vcmp.ge.s32.totalorder %v432, 2
        %vm503 = vcmp.ge.s32.totalorder %v433, 2
        %vm504 = vcmp.ge.s32.totalorder %v434, 2
        %vm505 = vcmp.ge.s32.totalorder %v435, 2
        %vm506 = vcmp.ge.s32.totalorder %v436, 2
        %v507 = vsub.f32 0.0, %v458
        %v508 = vsub.f32 0.0, %v459
        %v509 = vsub.f32 0.0, %v460
        %v510 = vsub.f32 0.0, %v461
        %v511 = vsub.f32 0.0, %v462
        %v512 = vsub.f32 0.0, %v463
        %v513 = vsub.f32 0.0, %v464
        %v514 = vsel %vm500, %v507, %v458
        %v515 = vsel %vm501, %v508, %v459
        %v516 = vsel %vm502, %v509, %v460
        %v517 = vsel %vm503, %v510, %v461
        %v518 = vsel %vm504, %v511, %v462
        %v519 = vsel %vm505, %v512, %v463
        %v520 = vsel %vm506, %v513, %v464
        %521 = vst [vmem:[%s137] sm:$0xff] %v493
        %522 = vst [vmem:[%s137 + $0x10] sm:$0xff] %v494
        %523 = vst [vmem:[%s137 + $0x20] sm:$0xff] %v495
        %524 = vst [vmem:[%s137 + $0x30] sm:$0xff] %v496
        %525 = vst [vmem:[%s137 + $0x40] sm:$0xff] %v497
        %526 = vst [vmem:[%s137 + $0x50] sm:$0xff] %v498
        %527 = vst [vmem:[%s137 + $0x60] sm:$0xff] %v499
        %528 = vst [vmem:[%s137 + $0x8] sm:$0xff] %v514
        %529 = vst [vmem:[%s137 + $0x18] sm:$0xff] %v515
        %530 = vst [vmem:[%s137 + $0x28] sm:$0xff] %v516
        %531 = vst [vmem:[%s137 + $0x38] sm:$0xff] %v517
        %532 = vst [vmem:[%s137 + $0x48] sm:$0xff] %v518
        %533 = vst [vmem:[%s137 + $0x58] sm:$0xff] %v519
        %534 = vst [vmem:[%s137 + $0x68] sm:$0xff] %v520
        %s535 = sand.u32 %s71, 1
        %s536 = scalar_lea.sflag [#allocation3], %s535
        %s537 = sand.u32 %s71, 1
        %s538 = smul.addr %s537, 112
        %s539 = scalar_lea.vmem [#allocation2], %s538
        // Predicated region
        $region29: #{tpu_custom_call.1} parent=27 // pred_check
          %p540 = pneg %p81
        $region30: #{tpu_custom_call.1} parent=27 // pred_check_branch
          %542 = sbr.rel (%p540) target = $region32
        $region31: #{tpu_custom_call.1} parent=27 // pred_region
          %s543 = smul.u32 7, %s16
          %s545 = ssub.s32 1792, 1792
          %546 = vsyncadd %s536, %s545
          %s547 = smul.addr %s543, 2
          %s548 = smul.addr %s547, 128
          %s549 = scalar_lea.hbm %s2, %s548
          %s550 = sshll.u32 %s539, 4
          %s551 = int_to_ptr.vmem [resolvable:$true] %s550
          %556 = dma.vmem_to_hbm [thread:$0]  %s551, 1792, %s549, %s536, 256, 256, 16
        $region32: #{tpu_custom_call.1} parent=27 // pred_fallthru
          _
      $region28: #{tpu_custom_call.1} parent=5 // pred_fallthru
        _
      %p557 = scmp.le.s32.totalorder 2, %s11
      // Predicated region
      $region33: #{tpu_custom_call.1} parent=5 // pred_check
        %p558 = pneg %p557
      $region34: #{tpu_custom_call.1} parent=5 // pred_check_branch
        %560 = sbr.rel (%p558) target = $region36
      $region35: #{tpu_custom_call.1} parent=5 // pred_region
        %s561 = ssub.s32 %s11, 2
        // Predicated region
        $region37: #{tpu_custom_call.1} parent=35 // pred_check
          %p562 = pneg %p87
        $region38: #{tpu_custom_call.1} parent=35 // pred_check_branch
          %564 = sbr.rel (%p562) target = $region40
        $region39: #{tpu_custom_call.1} parent=35 // pred_region
          %s565 = sand.u32 %s72, 1
          %s566 = scalar_lea.sflag [#allocation3], %s565
          %s567 = sand.u32 %s72, 1
          %s568 = smul.addr %s567, 112
          %s569 = scalar_lea.vmem [#allocation2], %s568
          %570 = dma.done %s566, 1792
        $region40: #{tpu_custom_call.1} parent=35 // pred_fallthru
          _
      $region36: #{tpu_custom_call.1} parent=5 // pred_fallthru
        _
    $region6: #{tpu_custom_call.1} parent=1 // loop_footer
      %s15 = sadd.s32 1, %s11
    $region7: #{tpu_custom_call.1} parent=1 // loop_footer_branch
      %10 = sbr.rel target = $region3
    $region8: #{tpu_custom_call.1} parent=1 // loop_exit
      _
    %571 = vsyncpa [#allocation3], 1
    %s572 = scalar_lea.sflag [#allocation3], 1
    %573 = vsyncpa %s572, 1

</llo_original>
